<compile_context>
chip_gen: v7x
topology: tpu7x:2x2x1
jax: 0.10.0
libtpu: 0.0.40
codegen_flags: <defaults>
</compile_context>

<pallas_src>
import functools

import jax
import jax.numpy as jnp
from jax import lax
from jax.experimental import pallas as pl
from jax.experimental.pallas import tpu as pltpu

EPS = 1e-5


# --------------------------------------------------------------------------------------------
# Pass 1: per-channel sum / sum-of-squares of relu(x)
# --------------------------------------------------------------------------------------------
def _stats_kernel(x_ref, sum_ref, sumsq_ref, *, channels_on_lanes):
    """x_ref: (TN, C, L) or (TN, L, C).  Accumulates over the trailing ('arbitrary') grid axis."""
    i = pl.program_id(1)

    @pl.when(i == 0)
    def _():
        sum_ref[...] = jnp.zeros_like(sum_ref)
        sumsq_ref[...] = jnp.zeros_like(sumsq_ref)

    r = jnp.maximum(x_ref[...].astype(jnp.float32), 0.0)
    r_b = jnp.sum(r, axis=0)            # sum over the batch-block axis -> (C, L) or (L, C)
    r2_b = jnp.sum(r * r, axis=0)
    if channels_on_lanes:               # (L, C): reduce the sublane (L) axis -> (1, C)
        sum_ref[...] += jnp.sum(r_b, axis=0, keepdims=True)
        sumsq_ref[...] += jnp.sum(r2_b, axis=0, keepdims=True)
    else:                               # (C, L): reduce the lane (L) axis -> (C, 1)
        sum_ref[...] += jnp.sum(r_b, axis=1, keepdims=True)
        sumsq_ref[...] += jnp.sum(r2_b, axis=1, keepdims=True)


# --------------------------------------------------------------------------------------------
# Pass 2: ReLU + folded BN + depthwise conv1d(k=3, zero pad=1) + residual
# --------------------------------------------------------------------------------------------
def _bn_conv_kernel(x_ref, params_ref, o_ref, *, channels_on_lanes):
    """x_ref/o_ref: (TN, C, L) or (TN, L, C); params_ref: (C, 6) or (6, C) packed
    [scale, shift, w0, w1, w2, bias] per channel (w0 hits x[l-1])."""
    x = x_ref[...].astype(jnp.float32)
    r = jnp.maximum(x, 0.0)
    p = params_ref[...].astype(jnp.float32)

    if channels_on_lanes:
        # (TN, L, C): channels on lanes, sequence on sublanes.
        scale, shift = p[0:1, :], p[1:2, :]
        w0, w1, w2, b = p[2:3, :], p[3:4, :], p[4:5, :], p[5:6, :]
        xn = r * scale + shift
        zero = jnp.zeros_like(xn[:, :1, :])
        x_prev = jnp.concatenate([zero, xn[:, :-1, :]], axis=1)   # xn[l-1], 0 at l = 0
        x_next = jnp.concatenate([xn[:, 1:, :], zero], axis=1)    # xn[l+1], 0 at l = L-1
    else:
        # (TN, C, L): channels on sublanes, sequence on lanes.
        scale, shift = p[:, 0:1], p[:, 1:2]
        w0, w1, w2, b = p[:, 2:3], p[:, 3:4], p[:, 4:5], p[:, 5:6]
        xn = r * scale + shift
        zero = jnp.zeros_like(xn[:, :, :1])
        x_prev = jnp.concatenate([zero, xn[:, :, :-1]], axis=2)   # xn[l-1], 0 at l = 0
        x_next = jnp.concatenate([xn[:, :, 1:], zero], axis=2)    # xn[l+1], 0 at l = L-1

    y = w0 * x_prev + w1 * xn + w2 * x_next + b
    o_ref[...] = (y + x).astype(o_ref.dtype)                      # residual with the original x


# --------------------------------------------------------------------------------------------
# Wrapper
# --------------------------------------------------------------------------------------------
def _pick_tn(n, bytes_per_batch_elem, target_bytes):
    """Largest divisor of n such that one block is <= target_bytes, while keeping >= 2 grid steps."""
    cap = max(1, target_bytes // max(1, bytes_per_batch_elem))
    if n >= 2:
        cap = min(cap, n // 2)          # keep >= 2 grid steps so both v7x TCs get work
    cap = int(min(cap, n))
    best = 1
    for d in range(1, cap + 1):
        if n % d == 0:
            best = d
    return best


def visual_conv1d(x_ncl, gamma, beta, conv_w, conv_b, *, target_block_bytes=4 << 20):
    """x_ncl: (N, C, L) like PyTorch.  conv_w: (C, 3) depthwise taps (tap 0 hits x[l-1]),
    conv_b: (C,).  BatchNorm uses training-mode batch statistics (biased variance over N, L)."""
    N, C, L = x_ncl.shape
    f32 = jnp.float32
    itemsize = x_ncl.dtype.itemsize

    # Lane-dense layout: put whichever of C / L is a 128-multiple on the lane axis.
    # (Wrapper transposes are layout plumbing; worth it for real emb_dim = 256/512.)
    channels_on_lanes = (C % 128 == 0) and (L % 128 != 0)
    if channels_on_lanes:
        x_work = jnp.transpose(x_ncl, (0, 2, 1))                  # (N, L, C)
        d1, d2 = L, C
    else:
        x_work = x_ncl                                            # (N, C, L)
        d1, d2 = C, L

    tn = _pick_tn(N, C * L * itemsize, target_block_bytes)
    n_blocks = N // tn
    num_shards = 2 if (n_blocks % 2 == 0 and n_blocks >= 2) else 1
    steps = n_blocks // num_shards

    block_bytes = tn * C * L * itemsize
    # Budget: pass 2 double-buffers both the x block and the out block (+ params).
    # Safe on v5e (128 MiB phys, 16 MiB default scoped), v6e (128 MiB) and v7x (64 MiB).
    vmem_limit_bytes = int(min(64 << 20, max(32 << 20, 5 * block_bytes)))

    # ---- Pass 1: per-channel sum / sum-of-squares of relu(x) over (N, L). ----
    stat_shape = (num_shards, 1, C) if channels_on_lanes else (num_shards, C, 1)
    stat_block_shape = (None, 1, C) if channels_on_lanes else (None, C, 1)
    stat_block = pl.BlockSpec(stat_block_shape, lambda s, i: (s, 0, 0))
    x_stats_block = pl.BlockSpec((tn, d1, d2), lambda s, i: (s * steps + i, 0, 0))

    s_parts, sq_parts = pl.pallas_call(
        functools.partial(_stats_kernel, channels_on_lanes=channels_on_lanes),
        out_shape=(jax.ShapeDtypeStruct(stat_shape, f32),
                   jax.ShapeDtypeStruct(stat_shape, f32)),
        grid_spec=pltpu.PrefetchScalarGridSpec(
            num_scalar_prefetch=0,
            grid=(num_shards, steps),
            in_specs=[x_stats_block],
            out_specs=(stat_block, stat_block)),
        compiler_params=pltpu.CompilerParams(
            dimension_semantics=("parallel", "arbitrary"),
            vmem_limit_bytes=vmem_limit_bytes),
        cost_estimate=pl.CostEstimate(
            flops=int(3 * N * C * L), transcendentals=0,
            bytes_accessed=int(itemsize * N * C * L)),
    )(x_work)

    # Tiny per-channel math on (C,) vectors: fold BN affine into one scale/shift pair and
    # pack all six per-channel parameters into a single resident table.
    s = jnp.sum(s_parts, axis=0).reshape(C)
    sq = jnp.sum(sq_parts, axis=0).reshape(C)
    cnt = jnp.asarray(N * L, f32)
    mean = s / cnt
    var = jnp.maximum(sq / cnt - mean * mean, 0.0)                # biased (training-mode) variance
    inv = lax.rsqrt(var + EPS)
    scale = gamma.astype(f32) * inv
    shift = beta.astype(f32) - scale * mean
    w = conv_w.astype(f32)                                        # (C, 3)
    params = jnp.stack(
        [scale, shift, w[:, 0], w[:, 1], w[:, 2], conv_b.astype(f32)], axis=-1)   # (C, 6)
    if channels_on_lanes:
        params = params.T                                         # (6, C): channels on lanes

    # ---- Pass 2: normalize + depthwise conv + residual, batch-blocked ('parallel' -> megacore). ----
    x_block = pl.BlockSpec((tn, d1, d2), lambda n: (n, 0, 0))
    p_block = pl.BlockSpec(params.shape, lambda n: (0, 0))        # resident across the whole grid

    out = pl.pallas_call(
        functools.partial(_bn_conv_kernel, channels_on_lanes=channels_on_lanes),
        out_shape=jax.ShapeDtypeStruct(x_work.shape, x_ncl.dtype),
        grid_spec=pltpu.PrefetchScalarGridSpec(
            num_scalar_prefetch=0,
            grid=(n_blocks,),
            in_specs=[x_block, p_block],
            out_specs=x_block),
        compiler_params=pltpu.CompilerParams(
            dimension_semantics=("parallel",),
            vmem_limit_bytes=vmem_limit_bytes),
        cost_estimate=pl.CostEstimate(
            flops=int(14 * N * C * L), transcendentals=0,
            bytes_accessed=int(2 * itemsize * N * C * L)),
    )(x_work, params)

    if channels_on_lanes:
        out = jnp.transpose(out, (0, 2, 1))                       # back to (N, C, L)
    return out


# --------------------------------------------------------------------------------------------
# Pure-JAX reference (PyTorch NCL layout) for the correctness check
# --------------------------------------------------------------------------------------------
def visual_conv1d_reference(x_ncl, gamma, beta, conv_w, conv_b):
    x = x_ncl.astype(jnp.float32)
    N, C, L = x.shape
    r = jnp.maximum(x, 0.0)
    mean = jnp.mean(r, axis=(0, 2), keepdims=True)
    var = jnp.mean((r - mean) ** 2, axis=(0, 2), keepdims=True)
    xn = (r - mean) / jnp.sqrt(var + EPS)
    xn = xn * gamma.reshape(1, C, 1) + beta.reshape(1, C, 1)
    w = conv_w.reshape(C, 1, 3).astype(jnp.float32)               # (O, I/groups, K)
    y = lax.conv_general_dilated(
        xn, w, window_strides=(1,), padding=[(1, 1)],
        dimension_numbers=("NCH", "OIH", "NCH"), feature_group_count=C)
    y = y + conv_b.reshape(1, C, 1)
    return (y + x).astype(x_ncl.dtype)


if __name__ == "__main__":
    key = jax.random.PRNGKey(0)

    def run_case(N, C, L):
        ks = jax.random.split(jax.random.fold_in(key, C * 1000 + L), 5)
        x = jax.random.normal(ks[0], (N, C, L), dtype=jnp.float32)
        gamma = 1.0 + 0.1 * jax.random.normal(ks[1], (C,), dtype=jnp.float32)
        beta = 0.1 * jax.random.normal(ks[2], (C,), dtype=jnp.float32)
        conv_w = 0.5 * jax.random.normal(ks[3], (C, 3), dtype=jnp.float32)
        conv_b = 0.1 * jax.random.normal(ks[4], (C,), dtype=jnp.float32)

        out = jax.block_until_ready(visual_conv1d(x, gamma, beta, conv_w, conv_b))
        ref = visual_conv1d_reference(x, gamma, beta, conv_w, conv_b)
        assert out.shape == (N, C, L)
        assert jnp.allclose(out, ref, atol=2e-4, rtol=2e-4), \
            f"mismatch vs reference at N={N}, C={C}, L={L}"

    # Native (N, C, L) path (L on lanes), batch-blocked, 2-way sharded stats pass.
    run_case(4, 16, 32)
    # Lane-dense path: emb_dim multiple of 128 -> channels on lanes via (N, L, C) layout.
    run_case(2, 128, 16)

    print("KERNEL_OK")
</pallas_src>

<mosaic_0001>
module attributes {stable_mosaic.version = 11 : i64} {
  func.func @_stats_kernel(%arg0: i32, %arg1: i32, %arg2: memref<2x16x32xf32, #tpu.memory_space<vmem>>, %arg3: memref<1x16x1xf32, #tpu.memory_space<vmem>>, %arg4: memref<1x16x1xf32, #tpu.memory_space<vmem>>) attributes {dimension_semantics = [#tpu.dimension_semantics<parallel>, #tpu.dimension_semantics<arbitrary>], iteration_bounds = array<i64: 2, 1>, scalar_prefetch = 0 : i64, scratch_operands = 0 : i64, tpu.core_type = #tpu.core_type<tc>, window_params = [{transform_indices = @transform_0, window_bounds = array<i64: 2, 16, 32>}, {transform_indices = @transform_1, window_bounds = array<i64: 1, 16, 1>}, {transform_indices = @transform_2, window_bounds = array<i64: 1, 16, 1>}]} {
    %c0_i32 = arith.constant 0 : i32
    %0 = arith.cmpi eq, %arg1, %c0_i32 : i32
    %1 = arith.extui %0 : i1 to i32
    %c0_i32_0 = arith.constant 0 : i32
    %2 = arith.cmpi ne, %1, %c0_i32_0 : i32
    scf.if %2 {
      %cst_19 = arith.constant 0.000000e+00 : f32
      %25 = vector.broadcast %cst_19 : f32 to vector<16x1xf32>
      %c0_20 = arith.constant 0 : index
      %c0_21 = arith.constant 0 : index
      %c0_22 = arith.constant 0 : index
      %26 = vector.load %arg3[%c0_20, %c0_21, %c0_22] : memref<1x16x1xf32, #tpu.memory_space<vmem>>, vector<1x16x1xf32>
      %27 = vector.shape_cast %26 : vector<1x16x1xf32> to vector<16x1xf32>
      %28 = vector.shape_cast %25 : vector<16x1xf32> to vector<1x16x1xf32>
      tpu.vector_store %arg3[%c0_20, %c0_21, %c0_22], %28 {strides = array<i32>} : memref<1x16x1xf32, #tpu.memory_space<vmem>>, vector<1x16x1xf32>,
      %cst_23 = arith.constant 0.000000e+00 : f32
      %29 = vector.broadcast %cst_23 : f32 to vector<16x1xf32>
      %c0_24 = arith.constant 0 : index
      %c0_25 = arith.constant 0 : index
      %c0_26 = arith.constant 0 : index
      %30 = vector.load %arg4[%c0_24, %c0_25, %c0_26] : memref<1x16x1xf32, #tpu.memory_space<vmem>>, vector<1x16x1xf32>
      %31 = vector.shape_cast %30 : vector<1x16x1xf32> to vector<16x1xf32>
      %32 = vector.shape_cast %29 : vector<16x1xf32> to vector<1x16x1xf32>
      tpu.vector_store %arg4[%c0_24, %c0_25, %c0_26], %32 {strides = array<i32>} : memref<1x16x1xf32, #tpu.memory_space<vmem>>, vector<1x16x1xf32>,
    } else {
    }
    %c0 = arith.constant 0 : index
    %c0_1 = arith.constant 0 : index
    %c0_2 = arith.constant 0 : index
    %3 = vector.load %arg2[%c0, %c0_1, %c0_2] : memref<2x16x32xf32, #tpu.memory_space<vmem>>, vector<2x16x32xf32>
    %cst = arith.constant 0.000000e+00 : f32
    %4 = vector.broadcast %cst : f32 to vector<2x16x32xf32>
    %5 = arith.maximumf %3, %4 : vector<2x16x32xf32>
    %cst_3 = arith.constant dense<0.000000e+00> : vector<16x32xf32>
    %6 = vector.multi_reduction <add>, %5, %cst_3 [0] : vector<2x16x32xf32> to vector<16x32xf32>
    %7 = arith.mulf %5, %5 : vector<2x16x32xf32>
    %cst_4 = arith.constant dense<0.000000e+00> : vector<16x32xf32>
    %8 = vector.multi_reduction <add>, %7, %cst_4 [0] : vector<2x16x32xf32> to vector<16x32xf32>
    %c0_5 = arith.constant 0 : index
    %c0_6 = arith.constant 0 : index
    %c0_7 = arith.constant 0 : index
    %9 = vector.load %arg3[%c0_5, %c0_6, %c0_7] : memref<1x16x1xf32, #tpu.memory_space<vmem>>, vector<1x16x1xf32>
    %10 = vector.shape_cast %9 : vector<1x16x1xf32> to vector<16x1xf32>
    %cst_8 = arith.constant dense<0.000000e+00> : vector<16xf32>
    %11 = vector.multi_reduction <add>, %6, %cst_8 [1] : vector<16x32xf32> to vector<16xf32>
    %12 = vector.shape_cast %11 : vector<16xf32> to vector<16x1xf32>
    %13 = arith.addf %10, %12 : vector<16x1xf32>
    %c0_9 = arith.constant 0 : index
    %c0_10 = arith.constant 0 : index
    %c0_11 = arith.constant 0 : index
    %14 = vector.load %arg3[%c0_9, %c0_10, %c0_11] : memref<1x16x1xf32, #tpu.memory_space<vmem>>, vector<1x16x1xf32>
    %15 = vector.shape_cast %14 : vector<1x16x1xf32> to vector<16x1xf32>
    %16 = vector.shape_cast %13 : vector<16x1xf32> to vector<1x16x1xf32>
    tpu.vector_store %arg3[%c0_9, %c0_10, %c0_11], %16 {strides = array<i32>} : memref<1x16x1xf32, #tpu.memory_space<vmem>>, vector<1x16x1xf32>,
    %c0_12 = arith.constant 0 : index
    %c0_13 = arith.constant 0 : index
    %c0_14 = arith.constant 0 : index
    %17 = vector.load %arg4[%c0_12, %c0_13, %c0_14] : memref<1x16x1xf32, #tpu.memory_space<vmem>>, vector<1x16x1xf32>
    %18 = vector.shape_cast %17 : vector<1x16x1xf32> to vector<16x1xf32>
    %cst_15 = arith.constant dense<0.000000e+00> : vector<16xf32>
    %19 = vector.multi_reduction <add>, %8, %cst_15 [1] : vector<16x32xf32> to vector<16xf32>
    %20 = vector.shape_cast %19 : vector<16xf32> to vector<16x1xf32>
    %21 = arith.addf %18, %20 : vector<16x1xf32>
    %c0_16 = arith.constant 0 : index
    %c0_17 = arith.constant 0 : index
    %c0_18 = arith.constant 0 : index
    %22 = vector.load %arg4[%c0_16, %c0_17, %c0_18] : memref<1x16x1xf32, #tpu.memory_space<vmem>>, vector<1x16x1xf32>
    %23 = vector.shape_cast %22 : vector<1x16x1xf32> to vector<16x1xf32>
    %24 = vector.shape_cast %21 : vector<16x1xf32> to vector<1x16x1xf32>
    tpu.vector_store %arg4[%c0_16, %c0_17, %c0_18], %24 {strides = array<i32>} : memref<1x16x1xf32, #tpu.memory_space<vmem>>, vector<1x16x1xf32>,
    return
  }
  func.func @transform_0(%arg0: i32, %arg1: i32) -> (i32, i32, i32) {
    %c1_i32 = arith.constant 1 : i32
    %0 = arith.muli %arg0, %c1_i32 : i32
    %1 = arith.addi %0, %arg1 : i32
    %c0_i32 = arith.constant 0 : i32
    %c0_i32_0 = arith.constant 0 : i32
    %c0_i32_1 = arith.constant 0 : i32
    return %1, %c0_i32, %c0_i32_0 : i32, i32, i32
  }
  func.func @transform_1(%arg0: i32, %arg1: i32) -> (i32, i32, i32) {
    %c0_i32 = arith.constant 0 : i32
    %c0_i32_0 = arith.constant 0 : i32
    %c0_i32_1 = arith.constant 0 : i32
    return %arg0, %c0_i32, %c0_i32_0 : i32, i32, i32
  }
  func.func @transform_2(%arg0: i32, %arg1: i32) -> (i32, i32, i32) {
    %c0_i32 = arith.constant 0 : i32
    %c0_i32_0 = arith.constant 0 : i32
    %c0_i32_1 = arith.constant 0 : i32
    return %arg0, %c0_i32, %c0_i32_0 : i32, i32, i32
  }
}

</mosaic_0001>

<llo_original>
// kernel: tpu_custom_call.1
$region0: #{tpu_custom_call.1}
  #allocation0 [shape = 'u32[]', space=smem, size = 0x4, offset = 0x4, fixed_abs, tag = 'smem constant byte address 0x4 - core index']
  #allocation1 [shape = 'u32[144,128]{1,0:T(1,128)}', space=vmem, size = 0x12000, scoped, tag = 'internal scratch']
  %s0 = inlined_call_operand.hbm [shape: f32[4,16,32], index: 0, kind: input, shape index: {}]
  %s1 = inlined_call_operand.vmem [shape: f32[2,16,1], index: 1, kind: output, shape index: {0}]
  %s2 = inlined_call_operand.vmem [shape: f32[2,16,1], index: 2, kind: output, shape index: {1}]
  %3 = xla_tuple %s1, %s2
  %s4 = sld [smem:[#allocation0]]
  $region53: #{tpu_custom_call.1} parent=0
    _
  %s6 = ssub.s32 1, %s4
  %s7 = scalar_select 0, %s6, %s4
  $region1: #{tpu_custom_call.1} parent=0
    #allocation2 [shape = 'u8[32768]{0}', space=vmem, size = 0x8000, scoped, tag = 'input window, operand 0']
    #allocation3 [shape = 's32[2]{0}', space=sflag, size = 0x8, scoped, tag = 'scoped memory for tpu_custom_call.1']
    %8 = vsyncpa [#allocation3], 0
    %s9 = scalar_lea.sflag [#allocation3], 1
    %10 = vsyncpa %s9, 0
    loop: start=0, step=1, limit=4
    $region2: #{tpu_custom_call.1} parent=1 // loop_pre_header
      _
    $region3: #{tpu_custom_call.1} parent=1 // loop_header
      %s12 = sphi 0, %s16
      %p13 = scmp.ge.s32.totalorder %s12, 4
      %s19 = sphi 0, %s31
      %s20 = sphi 0, %s27
      %s21 = sphi 0, %s19
      %s22 = sphi 0, %s20
      %s23 = sphi 0, %s21
      %s24 = sphi 0, %s22
      %s36 = sphi 0, %s38
      %s39 = sphi 0, %s36
      %s40 = sphi 0, %s39
      %s56 = sphi 0, %s40
      %s62 = sphi 0, %s64
      %s65 = sphi 0, %s62
      %s66 = sphi 0, %s65
      %s82 = sphi 0, %s66
      %s88 = sphi 0, %s90
      %s91 = sphi 0, %s88
      %s92 = sphi 0, %s91
      %s108 = sphi 0, %s92
    $region4: #{tpu_custom_call.1} parent=1 // loop_header_branch
      %15 = sbr.rel (%p13) target = $region8
    $region5: #{tpu_custom_call.1} parent=1 // loop_body
      %s17 = ssub.s32 %s12, 1
      %s18 = ssub.s32 %s12, 2
      %s25 = sadd.s32 1, %s20
      %p26 = scmp.ge.s32.totalorder %s25, 1
      %s27 = scalar_select %p26, 0, %s25
      %s28 = sadd.s32 1, %s19
      %s29 = scalar_select %p26, %s28, %s19
      %p30 = scmp.ge.s32.totalorder %s29, 2
      %s31 = scalar_select %p30, 0, %s29
      %s32 = sadd.s32 %s19, %s20
      %s33 = sadd.s32 %s31, %s27
      %s34 = ssub.s32 %s32, %s33
      %p35 = scmp.eq.s32.totalorder %s34, 0
      %s37 = sadd.s32 %s36, 1
      %s38 = scalar_select %p35, %s36, %s37
      %p41 = pneg %p35
      %p42 = scmp.eq.s32.totalorder %s12, 1
      %p43 = por %p41, %p42
      %p44 = scmp.ne.s32.totalorder %s36, %s39
      %p45 = scmp.eq.s32.totalorder %s12, 0
      %p46 = por %p44, %p45
      %p47 = scmp.ne.s32.totalorder %s36, %s39
      %p48 = scmp.eq.s32.totalorder %s17, 1
      %p49 = por %p47, %p48
      %p50 = scmp.ne.s32.totalorder %s39, %s40
      %p51 = scmp.eq.s32.totalorder %s17, 0
      %p52 = por %p50, %p51
      %p53 = scmp.ne.s32.totalorder %s39, %s40
      %p54 = scmp.eq.s32.totalorder %s18, 1
      %p55 = por %p53, %p54
      %p57 = scmp.ne.s32.totalorder %s40, %s56
      %p58 = scmp.eq.s32.totalorder %s18, 0
      %p59 = por %p57, %p58
      %s60 = ssub.s32 %s19, %s31
      %p61 = scmp.eq.s32.totalorder %s60, 0
      %s63 = sadd.s32 %s62, 1
      %s64 = scalar_select %p61, %s62, %s63
      %p67 = pneg %p61
      %p68 = scmp.eq.s32.totalorder %s12, 1
      %p69 = por %p67, %p68
      %p70 = scmp.ne.s32.totalorder %s62, %s65
      %p71 = scmp.eq.s32.totalorder %s12, 0
      %p72 = por %p70, %p71
      %p73 = scmp.ne.s32.totalorder %s62, %s65
      %p74 = scmp.eq.s32.totalorder %s17, 1
      %p75 = por %p73, %p74
      %p76 = scmp.ne.s32.totalorder %s65, %s66
      %p77 = scmp.eq.s32.totalorder %s17, 0
      %p78 = por %p76, %p77
      %p79 = scmp.ne.s32.totalorder %s65, %s66
      %p80 = scmp.eq.s32.totalorder %s18, 1
      %p81 = por %p79, %p80
      %p83 = scmp.ne.s32.totalorder %s66, %s82
      %p84 = scmp.eq.s32.totalorder %s18, 0
      %p85 = por %p83, %p84
      %s86 = ssub.s32 %s19, %s31
      %p87 = scmp.eq.s32.totalorder %s86, 0
      %s89 = sadd.s32 %s88, 1
      %s90 = scalar_select %p87, %s88, %s89
      %p93 = pneg %p87
      %p94 = scmp.eq.s32.totalorder %s12, 1
      %p95 = por %p93, %p94
      %p96 = scmp.ne.s32.totalorder %s88, %s91
      %p97 = scmp.eq.s32.totalorder %s12, 0
      %p98 = por %p96, %p97
      %p99 = scmp.ne.s32.totalorder %s88, %s91
      %p100 = scmp.eq.s32.totalorder %s17, 1
      %p101 = por %p99, %p100
      %p102 = scmp.ne.s32.totalorder %s91, %s92
      %p103 = scmp.eq.s32.totalorder %s17, 0
      %p104 = por %p102, %p103
      %p105 = scmp.ne.s32.totalorder %s91, %s92
      %p106 = scmp.eq.s32.totalorder %s18, 1
      %p107 = por %p105, %p106
      %p109 = scmp.ne.s32.totalorder %s92, %s108
      %p110 = scmp.eq.s32.totalorder %s18, 0
      %p111 = por %p109, %p110
      %p112 = scmp.le.s32.totalorder 1, %s12
      %p113 = scmp.lt.s32.totalorder %s12, 3
      %p114 = pnand %p112, %p113
      %p115 = pneg %p114
      // Predicated region
      $region9: #{tpu_custom_call.1} parent=5 // pred_check
        _
      $region10: #{tpu_custom_call.1} parent=5 // pred_check_branch
        %117 = sbr.rel (%p114) target = $region12
      $region11: #{tpu_custom_call.1} parent=5 // pred_region
        %s118 = ssub.s32 %s12, 1
      $region12: #{tpu_custom_call.1} parent=5 // pred_fallthru
        _
      %p119 = scmp.lt.s32.totalorder %s12, 2
      // Predicated region
      $region13: #{tpu_custom_call.1} parent=5 // pred_check
        %p120 = pneg %p119
      $region14: #{tpu_custom_call.1} parent=5 // pred_check_branch
        %122 = sbr.rel (%p120) target = $region16
      $region15: #{tpu_custom_call.1} parent=5 // pred_region
        // Predicated region
        $region17: #{tpu_custom_call.1} parent=15 // pred_check
          %p123 = pneg %p46
        $region18: #{tpu_custom_call.1} parent=15 // pred_check_branch
          %125 = sbr.rel (%p123) target = $region20
        $region19: #{tpu_custom_call.1} parent=15 // pred_region
          %s126 = sand.u32 %s36, 1
          %s127 = scalar_lea.sflag [#allocation3], %s126
          %s128 = sand.u32 %s36, 1
          %s129 = smul.addr %s128, 32
          %s130 = scalar_lea.vmem [#allocation2], %s129
          %s131 = sadd.s32 %s19, %s20
          %s132 = smul.u32 2, %s131
          %s134 = ssub.s32 512, 512
          %135 = vsyncadd %s127, %s134
          %s136 = smul.addr %s132, 2
          %s137 = smul.addr %s136, 128
          %s138 = scalar_lea.hbm %s0, %s137
          %s139 = sshll.u32 %s130, 4
          %s140 = int_to_ptr.vmem [resolvable:$true] %s139
          %145 = dma.hbm_to_vmem [thread:$0]  %s138, 512, %s140, %s127, 128, 128, 8
        $region20: #{tpu_custom_call.1} parent=15 // pred_fallthru
          _
      $region16: #{tpu_custom_call.1} parent=5 // pred_fallthru
        _
      %p146 = scmp.le.s32.totalorder 1, %s12
      %p147 = scmp.lt.s32.totalorder %s12, 3
      %p148 = pnand %p146, %p147
      %p149 = pneg %p148
      // Predicated region
      $region21: #{tpu_custom_call.1} parent=5 // pred_check
        _
      $region22: #{tpu_custom_call.1} parent=5 // pred_check_branch
        %151 = sbr.rel (%p148) target = $region24
      $region23: #{tpu_custom_call.1} parent=5 // pred_region
        %s152 = ssub.s32 %s12, 1
        %s153 = sand.u32 %s39, 1
        %s154 = scalar_lea.sflag [#allocation3], %s153
        %s155 = sand.u32 %s39, 1
        %s156 = smul.addr %s155, 32
        %s157 = scalar_lea.vmem [#allocation2], %s156
        // Predicated region
        $region25: #{tpu_custom_call.1} parent=23 // pred_check
          %p158 = pneg %p52
        $region26: #{tpu_custom_call.1} parent=23 // pred_check_branch
          %160 = sbr.rel (%p158) target = $region28
        $region27: #{tpu_custom_call.1} parent=23 // pred_region
          %161 = dma.done %s154, 512
        $region28: #{tpu_custom_call.1} parent=23 // pred_fallthru
          _
        %s162 = sand.u32 %s39, 1
        %s163 = scalar_lea.sflag [#allocation3], %s162
        %s164 = sand.u32 %s39, 1
        %s165 = smul.addr %s164, 32
        %s166 = scalar_lea.vmem [#allocation2], %s165
        %p167 = pneg %p52
        %p168 = pneg %p49
        %p169 = pneg %p78
        %p170 = pneg %p75
        %p171 = scmp.lt.s32.totalorder %s21, 1
        %s172 = scalar_select %p171, %s21, 1
        %s173 = smul.addr %s172, 2
        %s174 = smul.addr %s173, 8
        %s175 = scalar_lea.vmem %s1, %s174
        %p176 = pneg %p104
        %p177 = pneg %p101
        %p178 = scmp.lt.s32.totalorder %s21, 1
        %s179 = scalar_select %p178, %s21, 1
        %s180 = smul.addr %s179, 2
        %s181 = smul.addr %s180, 8
        %s182 = scalar_lea.vmem %s2, %s181
        %s183 = sadd.s32 %s21, %s22
        %s184 = smul.u32 2, %s183
        %p185 = scmp.lt.s32.totalorder %s21, 1
        %s186 = scalar_select %p185, %s21, 1
        %s187 = smul.addr %s186, 2
        %s188 = smul.addr %s187, 8
        %s189 = scalar_lea.vmem %s1, %s188
        %p190 = scmp.lt.s32.totalorder %s21, 1
        %s191 = scalar_select %p190, %s21, 1
        %s192 = smul.addr %s191, 2
        %s193 = smul.addr %s192, 8
        %s194 = scalar_lea.vmem %s2, %s193
        %p195 = scmp.eq.s32.totalorder %s22, 0
        // Predicated region
        $region29: #{tpu_custom_call.1} parent=23 // pred_check
          %p196 = pneg %p195
        $region30: #{tpu_custom_call.1} parent=23 // pred_check_branch
          %198 = sbr.rel (%p196) target = $region32
        $region31: #{tpu_custom_call.1} parent=23 // pred_region
          %vm199 = vcmask 7168
          %200 = vst.msk [vmem:[%s189] sm:$0xff] %vm199, 0.0
          %201 = vst.msk [vmem:[%s189 + $0x8] sm:$0xff] %vm199, 0.0
          %202 = vst.msk [vmem:[%s194] sm:$0xff] %vm199, 0.0
          %203 = vst.msk [vmem:[%s194 + $0x8] sm:$0xff] %vm199, 0.0
        $region32: #{tpu_custom_call.1} parent=23 // pred_fallthru
          _
        %v204 = vld [vmem:[%s157] sm:$0xff]
        %v205 = vld [vmem:[%s157 + $0x8] sm:$0xff]
        %v206 = vld [vmem:[%s157 + $0x10] sm:$0xff]
        %v207 = vld [vmem:[%s157 + $0x18] sm:$0xff]
        %v208 = vmax.f32 %v204, 0.0
        %v209 = vmax.f32 %v205, 0.0
        %v210 = vmax.f32 %v206, 0.0
        %v211 = vmax.f32 %v207, 0.0
        %vm212 = vcmask 261120
        %v213 = vsel %vm212, %v208, 0.0
        %v214 = vsel %vm212, %v210, 0.0
        %v215 = vadd.f32 %v213, %v214
        %v216 = vsel %vm212, %v209, 0.0
        %v217 = vsel %vm212, %v211, 0.0
        %v218 = vadd.f32 %v216, %v217
        %v219 = vmul.f32 %v208, %v208
        %v220 = vmul.f32 %v209, %v209
        %v221 = vmul.f32 %v210, %v210
        %v222 = vmul.f32 %v211, %v211
        %v223 = vsel %vm212, %v219, 0.0
        %v224 = vsel %vm212, %v221, 0.0
        %v225 = vadd.f32 %v223, %v224
        %v226 = vsel %vm212, %v220, 0.0
        %v227 = vsel %vm212, %v222, 0.0
        %v228 = vadd.f32 %v226, %v227
        %v229 = vld [vmem:[%s189] sm:$0xff]
        %v230 = vld [vmem:[%s189 + $0x8] sm:$0xff]
        %v231 = vsel %vm212, %v215, 0.0
        %232 = vadd.xlane.f32.xlu0 %v231
        %v233 = vpop.xlane.xlu0 %232
        %v234 = vsel %vm212, %v218, 0.0
        %235 = vadd.xlane.f32.xlu0 %v234
        %v236 = vpop.xlane.xlu0 %235
        %v237 = vadd.f32 %v229, %v233
        %v238 = vadd.f32 %v230, %v236
        %vm239 = vcmask 7168
        %240 = vst.msk [vmem:[%s189] sm:$0xff] %vm239, %v237
        %241 = vst.msk [vmem:[%s189 + $0x8] sm:$0xff] %vm239, %v238
        %v242 = vld [vmem:[%s194] sm:$0xff]
        %v243 = vld [vmem:[%s194 + $0x8] sm:$0xff]
        %v244 = vsel %vm212, %v225, 0.0
        %245 = vadd.xlane.f32.xlu0 %v244
        %v246 = vpop.xlane.xlu0 %245
        %v247 = vsel %vm212, %v228, 0.0
        %248 = vadd.xlane.f32.xlu0 %v247
        %v249 = vpop.xlane.xlu0 %248
        %v250 = vadd.f32 %v242, %v246
        %v251 = vadd.f32 %v243, %v249
        %252 = vst.msk [vmem:[%s194] sm:$0xff] %vm239, %v250
        %253 = vst.msk [vmem:[%s194 + $0x8] sm:$0xff] %vm239, %v251
        %p254 = scmp.lt.s32.totalorder %s21, 1
        %s255 = scalar_select %p254, %s21, 1
        %s256 = smul.addr %s255, 2
        %s257 = smul.addr %s256, 8
        %s258 = scalar_lea.vmem %s1, %s257
        %p259 = scmp.lt.s32.totalorder %s21, 1
        %s260 = scalar_select %p259, %s21, 1
        %s261 = smul.addr %s260, 2
        %s262 = smul.addr %s261, 8
        %s263 = scalar_lea.vmem %s2, %s262
        // Predicated region
        $region33: #{tpu_custom_call.1} parent=23 // pred_check
          %p264 = pneg %p75
        $region34: #{tpu_custom_call.1} parent=23 // pred_check_branch
          %266 = sbr.rel (%p264) target = $region36
        $region35: #{tpu_custom_call.1} parent=23 // pred_region
          _
        $region36: #{tpu_custom_call.1} parent=23 // pred_fallthru
          _
        // Predicated region
        $region37: #{tpu_custom_call.1} parent=23 // pred_check
          %p267 = pneg %p101
        $region38: #{tpu_custom_call.1} parent=23 // pred_check_branch
          %269 = sbr.rel (%p267) target = $region40
        $region39: #{tpu_custom_call.1} parent=23 // pred_region
          _
        $region40: #{tpu_custom_call.1} parent=23 // pred_fallthru
          _
      $region24: #{tpu_custom_call.1} parent=5 // pred_fallthru
        _
      %p270 = scmp.le.s32.totalorder 2, %s12
      // Predicated region
      $region41: #{tpu_custom_call.1} parent=5 // pred_check
        %p271 = pneg %p270
      $region42: #{tpu_custom_call.1} parent=5 // pred_check_branch
        %273 = sbr.rel (%p271) target = $region44
      $region43: #{tpu_custom_call.1} parent=5 // pred_region
        %s274 = ssub.s32 %s12, 2
        // Predicated region
        $region45: #{tpu_custom_call.1} parent=43 // pred_check
          %p275 = pneg %p81
        $region46: #{tpu_custom_call.1} parent=43 // pred_check_branch
          %277 = sbr.rel (%p275) target = $region48
        $region47: #{tpu_custom_call.1} parent=43 // pred_region
          %p278 = scmp.lt.s32.totalorder %s23, 1
          %s279 = scalar_select %p278, %s23, 1
          %s280 = smul.addr %s279, 2
          %s281 = smul.addr %s280, 8
          %s282 = scalar_lea.vmem %s1, %s281
        $region48: #{tpu_custom_call.1} parent=43 // pred_fallthru
          _
        // Predicated region
        $region49: #{tpu_custom_call.1} parent=43 // pred_check
          %p283 = pneg %p107
        $region50: #{tpu_custom_call.1} parent=43 // pred_check_branch
          %285 = sbr.rel (%p283) target = $region52
        $region51: #{tpu_custom_call.1} parent=43 // pred_region
          %p286 = scmp.lt.s32.totalorder %s23, 1
          %s287 = scalar_select %p286, %s23, 1
          %s288 = smul.addr %s287, 2
          %s289 = smul.addr %s288, 8
          %s290 = scalar_lea.vmem %s2, %s289
        $region52: #{tpu_custom_call.1} parent=43 // pred_fallthru
          _
      $region44: #{tpu_custom_call.1} parent=5 // pred_fallthru
        _
    $region6: #{tpu_custom_call.1} parent=1 // loop_footer
      %s16 = sadd.s32 1, %s12
    $region7: #{tpu_custom_call.1} parent=1 // loop_footer_branch
      %11 = sbr.rel target = $region3
    $region8: #{tpu_custom_call.1} parent=1 // loop_exit
      _
    %291 = vsyncpa [#allocation3], 1
    %s292 = scalar_lea.sflag [#allocation3], 1
    %293 = vsyncpa %s292, 1

</llo_original>
